<compile_context>
chip_gen: v7x
topology: tpu7x:2x2x1
jax: 0.10.0
libtpu: 0.0.40
codegen_flags: <defaults>
</compile_context>

<pallas_src>
import functools

import jax
import jax.numpy as jnp
from jax.experimental import pallas as pl
from jax.experimental.pallas import tpu as pltpu


def _conv1x1_kernel(w_ref, b_ref, x_ref, o_ref, *, n_labels, in_chans):
    # w_ref: (K, C) SMEM scalars     b_ref: (K,) SMEM scalars
    # x_ref: (C, tile_s, 128) VMEM   o_ref: (K, tile_s, 128) VMEM
    for k in range(n_labels):                     # fully unrolled: K*C VPU FMAs
        acc = x_ref[0] * w_ref[k, 0] + b_ref[k]   # dense (tile_s, 128) plane
        for c in range(1, in_chans):
            acc = acc + x_ref[c] * w_ref[k, c]
        o_ref[k] = acc.astype(o_ref.dtype)        # unmasked full-vreg stores


def output_transition_forward(x_ncdhw, weight, bias, *, max_tile_s=1024):
    """1x1x1 Conv3d forward.

    x_ncdhw: (N, C, D, H, W) float32
    weight : (n_labels, C)  float32   (squeezed Conv3d weight (K, C, 1, 1, 1))
    bias   : (n_labels,)    float32
    returns: (N, n_labels, D, H, W) float32
    """
    N, C, D, H, W = x_ncdhw.shape
    K = weight.shape[0]
    M = D * H * W

    # Pack spatial axis as (S, 128): lanes dense, all sublanes of each vreg used.
    S = pl.cdiv(M, 128)
    M_pad = S * 128
    x_flat = x_ncdhw.reshape(N, C, M)             # free reshape, no transpose
    if M_pad != M:
        # Rare fallback: pad spatial axis to a multiple of 128 (wrapper-side).
        x_flat = jnp.pad(x_flat, ((0, 0), (0, 0), (0, M_pad - M)))
    x_packed = x_flat.reshape(N, C, S, 128)       # free reshape

    tile_s = min(S, max_tile_s)                   # multiple of 8 unless == S
    grid = (N, pl.cdiv(S, tile_s))                # ragged last block handled by Pallas

    kernel = functools.partial(_conv1x1_kernel, n_labels=K, in_chans=C)

    out_packed = pl.pallas_call(
        kernel,
        out_shape=jax.ShapeDtypeStruct((N, K, S, 128), x_packed.dtype),
        grid_spec=pltpu.PrefetchScalarGridSpec(
            # weight + bias are prefetched into SMEM and read as scalars.
            num_scalar_prefetch=2,
            grid=grid,
            in_specs=[
                pl.BlockSpec((None, C, tile_s, 128),
                             lambda n, m, w, b: (n, 0, m, 0)),
            ],
            out_specs=pl.BlockSpec((None, K, tile_s, 128),
                                   lambda n, m, w, b: (n, 0, m, 0)),
        ),
        compiler_params=pltpu.CompilerParams(
            # Both axes parallel: v7x megacore can shard the m-tile axis when N
            # is small.  Raise the scoped VMEM limit for v5e's 16 MiB default;
            # 32 MiB is within every generation's physical VMEM (v7x = 64 MiB).
            dimension_semantics=("parallel", "parallel"),
            vmem_limit_bytes=32 * 1024 * 1024),
    )(weight, bias, x_packed)

    out_flat = out_packed.reshape(N, K, M_pad)    # free reshape
    if M_pad != M:
        out_flat = out_flat[:, :, :M]
    return out_flat.reshape(N, K, D, H, W)        # free reshape


def _reference_forward(x_ncdhw, weight, bias):
    # Plain-JAX reference of a kernel_size=1 Conv3d.
    return (jnp.einsum("ncdhw,kc->nkdhw", x_ncdhw, weight)
            + bias[None, :, None, None, None])


if __name__ == "__main__":
    key = jax.random.PRNGKey(0)
    k_x, k_w, k_b = jax.random.split(key, 3)

    # Small shapes consistent with the module: inChans=4, n_labels=3.
    N, C, D, H, W = 2, 4, 8, 8, 8
    n_labels = 3

    x = jax.random.normal(k_x, (N, C, D, H, W), dtype=jnp.float32)
    # Conv3d weight is (K, C, 1, 1, 1); we keep the squeezed (K, C) form.
    weight = jax.random.normal(k_w, (n_labels, C), dtype=jnp.float32) * 0.1
    bias = jax.random.normal(k_b, (n_labels,), dtype=jnp.float32) * 0.1

    out = jax.jit(output_transition_forward)(x, weight, bias)
    out = jax.block_until_ready(out)

    ref = _reference_forward(x, weight, bias)
    assert out.shape == (N, n_labels, D, H, W), out.shape
    assert jnp.allclose(out, ref, atol=1e-5, rtol=1e-5), "mismatch vs reference"

    print("KERNEL_OK")
</pallas_src>

<mosaic_0001>
module attributes {stable_mosaic.version = 11 : i64} {
  func.func @_conv1x1_kernel(%arg0: i32, %arg1: i32, %arg2: memref<3x4xf32, #tpu.memory_space<smem>>, %arg3: memref<3xf32, #tpu.memory_space<smem>>, %arg4: memref<1x4x4x128xf32, #tpu.memory_space<vmem>>, %arg5: memref<1x3x4x128xf32, #tpu.memory_space<vmem>>) attributes {dimension_semantics = [#tpu.dimension_semantics<parallel>, #tpu.dimension_semantics<parallel>], iteration_bounds = array<i64: 2, 1>, scalar_prefetch = 2 : i64, scratch_operands = 0 : i64, tpu.core_type = #tpu.core_type<tc>, window_params = [{transform_indices = @transform_0, window_bounds = array<i64: 1, 4, 4, 128>}, {transform_indices = @transform_1, window_bounds = array<i64: 1, 3, 4, 128>}]} {
    %c0 = arith.constant 0 : index
    %c0_0 = arith.constant 0 : index
    %c0_1 = arith.constant 0 : index
    %c0_2 = arith.constant 0 : index
    %0 = vector.load %arg4[%c0, %c0_0, %c0_1, %c0_2] : memref<1x4x4x128xf32, #tpu.memory_space<vmem>>, vector<1x1x4x128xf32>
    %1 = vector.shape_cast %0 : vector<1x1x4x128xf32> to vector<4x128xf32>
    %c0_3 = arith.constant 0 : index
    %c0_4 = arith.constant 0 : index
    %2 = memref.load %arg2[%c0_3, %c0_4] : memref<3x4xf32, #tpu.memory_space<smem>>
    %3 = vector.broadcast %2 : f32 to vector<4x128xf32>
    %4 = arith.mulf %1, %3 : vector<4x128xf32>
    %c0_5 = arith.constant 0 : index
    %5 = memref.load %arg3[%c0_5] : memref<3xf32, #tpu.memory_space<smem>>
    %6 = vector.broadcast %5 : f32 to vector<4x128xf32>
    %7 = arith.addf %4, %6 : vector<4x128xf32>
    %c0_6 = arith.constant 0 : index
    %c1 = arith.constant 1 : index
    %c0_7 = arith.constant 0 : index
    %c0_8 = arith.constant 0 : index
    %8 = vector.load %arg4[%c0_6, %c1, %c0_7, %c0_8] : memref<1x4x4x128xf32, #tpu.memory_space<vmem>>, vector<1x1x4x128xf32>
    %9 = vector.shape_cast %8 : vector<1x1x4x128xf32> to vector<4x128xf32>
    %c0_9 = arith.constant 0 : index
    %c1_10 = arith.constant 1 : index
    %10 = memref.load %arg2[%c0_9, %c1_10] : memref<3x4xf32, #tpu.memory_space<smem>>
    %11 = vector.broadcast %10 : f32 to vector<4x128xf32>
    %12 = arith.mulf %9, %11 : vector<4x128xf32>
    %13 = arith.addf %7, %12 : vector<4x128xf32>
    %c0_11 = arith.constant 0 : index
    %c2 = arith.constant 2 : index
    %c0_12 = arith.constant 0 : index
    %c0_13 = arith.constant 0 : index
    %14 = vector.load %arg4[%c0_11, %c2, %c0_12, %c0_13] : memref<1x4x4x128xf32, #tpu.memory_space<vmem>>, vector<1x1x4x128xf32>
    %15 = vector.shape_cast %14 : vector<1x1x4x128xf32> to vector<4x128xf32>
    %c0_14 = arith.constant 0 : index
    %c2_15 = arith.constant 2 : index
    %16 = memref.load %arg2[%c0_14, %c2_15] : memref<3x4xf32, #tpu.memory_space<smem>>
    %17 = vector.broadcast %16 : f32 to vector<4x128xf32>
    %18 = arith.mulf %15, %17 : vector<4x128xf32>
    %19 = arith.addf %13, %18 : vector<4x128xf32>
    %c0_16 = arith.constant 0 : index
    %c3 = arith.constant 3 : index
    %c0_17 = arith.constant 0 : index
    %c0_18 = arith.constant 0 : index
    %20 = vector.load %arg4[%c0_16, %c3, %c0_17, %c0_18] : memref<1x4x4x128xf32, #tpu.memory_space<vmem>>, vector<1x1x4x128xf32>
    %21 = vector.shape_cast %20 : vector<1x1x4x128xf32> to vector<4x128xf32>
    %c0_19 = arith.constant 0 : index
    %c3_20 = arith.constant 3 : index
    %22 = memref.load %arg2[%c0_19, %c3_20] : memref<3x4xf32, #tpu.memory_space<smem>>
    %23 = vector.broadcast %22 : f32 to vector<4x128xf32>
    %24 = arith.mulf %21, %23 : vector<4x128xf32>
    %25 = arith.addf %19, %24 : vector<4x128xf32>
    %c0_21 = arith.constant 0 : index
    %c0_22 = arith.constant 0 : index
    %c0_23 = arith.constant 0 : index
    %c0_24 = arith.constant 0 : index
    %26 = vector.load %arg5[%c0_21, %c0_22, %c0_23, %c0_24] : memref<1x3x4x128xf32, #tpu.memory_space<vmem>>, vector<1x1x4x128xf32>
    %27 = vector.shape_cast %26 : vector<1x1x4x128xf32> to vector<4x128xf32>
    %28 = vector.shape_cast %25 : vector<4x128xf32> to vector<1x1x4x128xf32>
    tpu.vector_store %arg5[%c0_21, %c0_22, %c0_23, %c0_24], %28 {strides = array<i32>} : memref<1x3x4x128xf32, #tpu.memory_space<vmem>>, vector<1x1x4x128xf32>,
    %c0_25 = arith.constant 0 : index
    %c0_26 = arith.constant 0 : index
    %c0_27 = arith.constant 0 : index
    %c0_28 = arith.constant 0 : index
    %29 = vector.load %arg4[%c0_25, %c0_26, %c0_27, %c0_28] : memref<1x4x4x128xf32, #tpu.memory_space<vmem>>, vector<1x1x4x128xf32>
    %30 = vector.shape_cast %29 : vector<1x1x4x128xf32> to vector<4x128xf32>
    %c1_29 = arith.constant 1 : index
    %c0_30 = arith.constant 0 : index
    %31 = memref.load %arg2[%c1_29, %c0_30] : memref<3x4xf32, #tpu.memory_space<smem>>
    %32 = vector.broadcast %31 : f32 to vector<4x128xf32>
    %33 = arith.mulf %30, %32 : vector<4x128xf32>
    %c1_31 = arith.constant 1 : index
    %34 = memref.load %arg3[%c1_31] : memref<3xf32, #tpu.memory_space<smem>>
    %35 = vector.broadcast %34 : f32 to vector<4x128xf32>
    %36 = arith.addf %33, %35 : vector<4x128xf32>
    %c0_32 = arith.constant 0 : index
    %c1_33 = arith.constant 1 : index
    %c0_34 = arith.constant 0 : index
    %c0_35 = arith.constant 0 : index
    %37 = vector.load %arg4[%c0_32, %c1_33, %c0_34, %c0_35] : memref<1x4x4x128xf32, #tpu.memory_space<vmem>>, vector<1x1x4x128xf32>
    %38 = vector.shape_cast %37 : vector<1x1x4x128xf32> to vector<4x128xf32>
    %c1_36 = arith.constant 1 : index
    %c1_37 = arith.constant 1 : index
    %39 = memref.load %arg2[%c1_36, %c1_37] : memref<3x4xf32, #tpu.memory_space<smem>>
    %40 = vector.broadcast %39 : f32 to vector<4x128xf32>
    %41 = arith.mulf %38, %40 : vector<4x128xf32>
    %42 = arith.addf %36, %41 : vector<4x128xf32>
    %c0_38 = arith.constant 0 : index
    %c2_39 = arith.constant 2 : index
    %c0_40 = arith.constant 0 : index
    %c0_41 = arith.constant 0 : index
    %43 = vector.load %arg4[%c0_38, %c2_39, %c0_40, %c0_41] : memref<1x4x4x128xf32, #tpu.memory_space<vmem>>, vector<1x1x4x128xf32>
    %44 = vector.shape_cast %43 : vector<1x1x4x128xf32> to vector<4x128xf32>
    %c1_42 = arith.constant 1 : index
    %c2_43 = arith.constant 2 : index
    %45 = memref.load %arg2[%c1_42, %c2_43] : memref<3x4xf32, #tpu.memory_space<smem>>
    %46 = vector.broadcast %45 : f32 to vector<4x128xf32>
    %47 = arith.mulf %44, %46 : vector<4x128xf32>
    %48 = arith.addf %42, %47 : vector<4x128xf32>
    %c0_44 = arith.constant 0 : index
    %c3_45 = arith.constant 3 : index
    %c0_46 = arith.constant 0 : index
    %c0_47 = arith.constant 0 : index
    %49 = vector.load %arg4[%c0_44, %c3_45, %c0_46, %c0_47] : memref<1x4x4x128xf32, #tpu.memory_space<vmem>>, vector<1x1x4x128xf32>
    %50 = vector.shape_cast %49 : vector<1x1x4x128xf32> to vector<4x128xf32>
    %c1_48 = arith.constant 1 : index
    %c3_49 = arith.constant 3 : index
    %51 = memref.load %arg2[%c1_48, %c3_49] : memref<3x4xf32, #tpu.memory_space<smem>>
    %52 = vector.broadcast %51 : f32 to vector<4x128xf32>
    %53 = arith.mulf %50, %52 : vector<4x128xf32>
    %54 = arith.addf %48, %53 : vector<4x128xf32>
    %c0_50 = arith.constant 0 : index
    %c1_51 = arith.constant 1 : index
    %c0_52 = arith.constant 0 : index
    %c0_53 = arith.constant 0 : index
    %55 = vector.load %arg5[%c0_50, %c1_51, %c0_52, %c0_53] : memref<1x3x4x128xf32, #tpu.memory_space<vmem>>, vector<1x1x4x128xf32>
    %56 = vector.shape_cast %55 : vector<1x1x4x128xf32> to vector<4x128xf32>
    %57 = vector.shape_cast %54 : vector<4x128xf32> to vector<1x1x4x128xf32>
    tpu.vector_store %arg5[%c0_50, %c1_51, %c0_52, %c0_53], %57 {strides = array<i32>} : memref<1x3x4x128xf32, #tpu.memory_space<vmem>>, vector<1x1x4x128xf32>,
    %c0_54 = arith.constant 0 : index
    %c0_55 = arith.constant 0 : index
    %c0_56 = arith.constant 0 : index
    %c0_57 = arith.constant 0 : index
    %58 = vector.load %arg4[%c0_54, %c0_55, %c0_56, %c0_57] : memref<1x4x4x128xf32, #tpu.memory_space<vmem>>, vector<1x1x4x128xf32>
    %59 = vector.shape_cast %58 : vector<1x1x4x128xf32> to vector<4x128xf32>
    %c2_58 = arith.constant 2 : index
    %c0_59 = arith.constant 0 : index
    %60 = memref.load %arg2[%c2_58, %c0_59] : memref<3x4xf32, #tpu.memory_space<smem>>
    %61 = vector.broadcast %60 : f32 to vector<4x128xf32>
    %62 = arith.mulf %59, %61 : vector<4x128xf32>
    %c2_60 = arith.constant 2 : index
    %63 = memref.load %arg3[%c2_60] : memref<3xf32, #tpu.memory_space<smem>>
    %64 = vector.broadcast %63 : f32 to vector<4x128xf32>
    %65 = arith.addf %62, %64 : vector<4x128xf32>
    %c0_61 = arith.constant 0 : index
    %c1_62 = arith.constant 1 : index
    %c0_63 = arith.constant 0 : index
    %c0_64 = arith.constant 0 : index
    %66 = vector.load %arg4[%c0_61, %c1_62, %c0_63, %c0_64] : memref<1x4x4x128xf32, #tpu.memory_space<vmem>>, vector<1x1x4x128xf32>
    %67 = vector.shape_cast %66 : vector<1x1x4x128xf32> to vector<4x128xf32>
    %c2_65 = arith.constant 2 : index
    %c1_66 = arith.constant 1 : index
    %68 = memref.load %arg2[%c2_65, %c1_66] : memref<3x4xf32, #tpu.memory_space<smem>>
    %69 = vector.broadcast %68 : f32 to vector<4x128xf32>
    %70 = arith.mulf %67, %69 : vector<4x128xf32>
    %71 = arith.addf %65, %70 : vector<4x128xf32>
    %c0_67 = arith.constant 0 : index
    %c2_68 = arith.constant 2 : index
    %c0_69 = arith.constant 0 : index
    %c0_70 = arith.constant 0 : index
    %72 = vector.load %arg4[%c0_67, %c2_68, %c0_69, %c0_70] : memref<1x4x4x128xf32, #tpu.memory_space<vmem>>, vector<1x1x4x128xf32>
    %73 = vector.shape_cast %72 : vector<1x1x4x128xf32> to vector<4x128xf32>
    %c2_71 = arith.constant 2 : index
    %c2_72 = arith.constant 2 : index
    %74 = memref.load %arg2[%c2_71, %c2_72] : memref<3x4xf32, #tpu.memory_space<smem>>
    %75 = vector.broadcast %74 : f32 to vector<4x128xf32>
    %76 = arith.mulf %73, %75 : vector<4x128xf32>
    %77 = arith.addf %71, %76 : vector<4x128xf32>
    %c0_73 = arith.constant 0 : index
    %c3_74 = arith.constant 3 : index
    %c0_75 = arith.constant 0 : index
    %c0_76 = arith.constant 0 : index
    %78 = vector.load %arg4[%c0_73, %c3_74, %c0_75, %c0_76] : memref<1x4x4x128xf32, #tpu.memory_space<vmem>>, vector<1x1x4x128xf32>
    %79 = vector.shape_cast %78 : vector<1x1x4x128xf32> to vector<4x128xf32>
    %c2_77 = arith.constant 2 : index
    %c3_78 = arith.constant 3 : index
    %80 = memref.load %arg2[%c2_77, %c3_78] : memref<3x4xf32, #tpu.memory_space<smem>>
    %81 = vector.broadcast %80 : f32 to vector<4x128xf32>
    %82 = arith.mulf %79, %81 : vector<4x128xf32>
    %83 = arith.addf %77, %82 : vector<4x128xf32>
    %c0_79 = arith.constant 0 : index
    %c2_80 = arith.constant 2 : index
    %c0_81 = arith.constant 0 : index
    %c0_82 = arith.constant 0 : index
    %84 = vector.load %arg5[%c0_79, %c2_80, %c0_81, %c0_82] : memref<1x3x4x128xf32, #tpu.memory_space<vmem>>, vector<1x1x4x128xf32>
    %85 = vector.shape_cast %84 : vector<1x1x4x128xf32> to vector<4x128xf32>
    %86 = vector.shape_cast %83 : vector<4x128xf32> to vector<1x1x4x128xf32>
    tpu.vector_store %arg5[%c0_79, %c2_80, %c0_81, %c0_82], %86 {strides = array<i32>} : memref<1x3x4x128xf32, #tpu.memory_space<vmem>>, vector<1x1x4x128xf32>,
    return
  }
  func.func @transform_0(%arg0: i32, %arg1: i32, %arg2: memref<3x4xf32, #tpu.memory_space<smem>>, %arg3: memref<3xf32, #tpu.memory_space<smem>>) -> (i32, i32, i32, i32) {
    %c0_i32 = arith.constant 0 : i32
    %c0_i32_0 = arith.constant 0 : i32
    %c0_i32_1 = arith.constant 0 : i32
    return %arg0, %c0_i32, %arg1, %c0_i32_0 : i32, i32, i32, i32
  }
  func.func @transform_1(%arg0: i32, %arg1: i32, %arg2: memref<3x4xf32, #tpu.memory_space<smem>>, %arg3: memref<3xf32, #tpu.memory_space<smem>>) -> (i32, i32, i32, i32) {
    %c0_i32 = arith.constant 0 : i32
    %c0_i32_0 = arith.constant 0 : i32
    %c0_i32_1 = arith.constant 0 : i32
    return %arg0, %c0_i32, %arg1, %c0_i32_0 : i32, i32, i32, i32
  }
}

</mosaic_0001>

<llo_original>
// kernel: output_transition_forward.1
$region0: #{output_transition_forward.1}
  #allocation0 [shape = 'u32[]', space=smem, size = 0x4, offset = 0x4, fixed_abs, tag = 'smem constant byte address 0x4 - core index']
  #allocation1 [shape = 'u32[144,128]{1,0:T(1,128)}', space=vmem, size = 0x12000, scoped, tag = 'internal scratch']
  #allocation2 [shape = 's32[1]{0}', space=sflag, size = 0x4, scoped, tag = 'scoped memory for output_transition_forward.1']
  #allocation3 [shape = 'u8[2048]{0}', space=smem, size = 0x800, scoped, tag = 'prefetched SMEM operand 0']
  #allocation4 [shape = 'u8[512]{0}', space=smem, size = 0x200, scoped, tag = 'prefetched SMEM operand 1']
  %s0 = inlined_call_operand.vmem [shape: f32[3,4], index: 0, kind: input, shape index: {}]
  %s1 = inlined_call_operand.vmem [shape: f32[3], index: 1, kind: input, shape index: {}]
  %s2 = inlined_call_operand.vmem [shape: f32[2,4,4,128], index: 2, kind: input, shape index: {}]
  %s3 = inlined_call_operand.vmem [shape: f32[2,3,4,128], index: 3, kind: output, shape index: {}]
  %s4 = sld [smem:[#allocation0]]
  $region37: #{output_transition_forward.1} parent=0
    _
  %s6 = ssub.s32 1, %s4
  %s7 = scalar_select 0, %s6, %s4
  %s8 = sshll.u32 %s0, 4
  %s9 = int_to_ptr.vmem [resolvable:$true] %s8
  %11 = dma.vmem_to_smem %s9, 64, [#allocation3], [#allocation2]
  %s12 = sshll.u32 %s1, 4
  %s13 = int_to_ptr.vmem [resolvable:$true] %s12
  %15 = dma.vmem_to_smem %s13, 16, [#allocation4], [#allocation2]
  %16 = dma.done [#allocation2], 80
  %17 = sfence
  loop: start=0, step=1, limit=4
  $region2: #{output_transition_forward.1} parent=0 // loop_pre_header
    _
  $region3: #{output_transition_forward.1} parent=0 // loop_header
    %s19 = sphi 0, %s23
    %p20 = scmp.ge.s32.totalorder %s19, 4
    %s26 = sphi 0, %s38
    %s27 = sphi 0, %s34
    %s28 = sphi 0, %s26
    %s29 = sphi 0, %s27
    %s30 = sphi 0, %s28
    %s31 = sphi 0, %s29
    %s43 = sphi 0, %s45
    %s46 = sphi 0, %s43
    %s47 = sphi 0, %s46
    %s63 = sphi 0, %s47
    %s71 = sphi 0, %s73
    %s74 = sphi 0, %s71
    %s75 = sphi 0, %s74
    %s91 = sphi 0, %s75
  $region4: #{output_transition_forward.1} parent=0 // loop_header_branch
    %22 = sbr.rel (%p20) target = $region8
  $region5: #{output_transition_forward.1} parent=0 // loop_body
    %s24 = ssub.s32 %s19, 1
    %s25 = ssub.s32 %s19, 2
    %s32 = sadd.s32 1, %s27
    %p33 = scmp.ge.s32.totalorder %s32, 1
    %s34 = scalar_select %p33, 0, %s32
    %s35 = sadd.s32 1, %s26
    %s36 = scalar_select %p33, %s35, %s26
    %p37 = scmp.ge.s32.totalorder %s36, 2
    %s38 = scalar_select %p37, 0, %s36
    %s39 = ssub.s32 %s26, %s38
    %s40 = ssub.s32 %s27, %s34
    %s41 = sor.u32 %s39, %s40
    %p42 = scmp.eq.s32.totalorder %s41, 0
    %s44 = sadd.s32 %s43, 1
    %s45 = scalar_select %p42, %s43, %s44
    %p48 = pneg %p42
    %p49 = scmp.eq.s32.totalorder %s19, 1
    %p50 = por %p48, %p49
    %p51 = scmp.ne.s32.totalorder %s43, %s46
    %p52 = scmp.eq.s32.totalorder %s19, 0
    %p53 = por %p51, %p52
    %p54 = scmp.ne.s32.totalorder %s43, %s46
    %p55 = scmp.eq.s32.totalorder %s24, 1
    %p56 = por %p54, %p55
    %p57 = scmp.ne.s32.totalorder %s46, %s47
    %p58 = scmp.eq.s32.totalorder %s24, 0
    %p59 = por %p57, %p58
    %p60 = scmp.ne.s32.totalorder %s46, %s47
    %p61 = scmp.eq.s32.totalorder %s25, 1
    %p62 = por %p60, %p61
    %p64 = scmp.ne.s32.totalorder %s47, %s63
    %p65 = scmp.eq.s32.totalorder %s25, 0
    %p66 = por %p64, %p65
    %s67 = ssub.s32 %s26, %s38
    %s68 = ssub.s32 %s27, %s34
    %s69 = sor.u32 %s67, %s68
    %p70 = scmp.eq.s32.totalorder %s69, 0
    %s72 = sadd.s32 %s71, 1
    %s73 = scalar_select %p70, %s71, %s72
    %p76 = pneg %p70
    %p77 = scmp.eq.s32.totalorder %s19, 1
    %p78 = por %p76, %p77
    %p79 = scmp.ne.s32.totalorder %s71, %s74
    %p80 = scmp.eq.s32.totalorder %s19, 0
    %p81 = por %p79, %p80
    %p82 = scmp.ne.s32.totalorder %s71, %s74
    %p83 = scmp.eq.s32.totalorder %s24, 1
    %p84 = por %p82, %p83
    %p85 = scmp.ne.s32.totalorder %s74, %s75
    %p86 = scmp.eq.s32.totalorder %s24, 0
    %p87 = por %p85, %p86
    %p88 = scmp.ne.s32.totalorder %s74, %s75
    %p89 = scmp.eq.s32.totalorder %s25, 1
    %p90 = por %p88, %p89
    %p92 = scmp.ne.s32.totalorder %s75, %s91
    %p93 = scmp.eq.s32.totalorder %s25, 0
    %p94 = por %p92, %p93
    %p95 = scmp.le.s32.totalorder 1, %s19
    %p96 = scmp.lt.s32.totalorder %s19, 3
    %p97 = pnand %p95, %p96
    %p98 = pneg %p97
    // Predicated region
    $region9: #{output_transition_forward.1} parent=5 // pred_check
      _
    $region10: #{output_transition_forward.1} parent=5 // pred_check_branch
      %100 = sbr.rel (%p97) target = $region12
    $region11: #{output_transition_forward.1} parent=5 // pred_region
      %s101 = ssub.s32 %s19, 1
    $region12: #{output_transition_forward.1} parent=5 // pred_fallthru
      _
    %p102 = scmp.lt.s32.totalorder %s19, 2
    // Predicated region
    $region13: #{output_transition_forward.1} parent=5 // pred_check
      %p103 = pneg %p102
    $region14: #{output_transition_forward.1} parent=5 // pred_check_branch
      %105 = sbr.rel (%p103) target = $region16
    $region15: #{output_transition_forward.1} parent=5 // pred_region
      // Predicated region
      $region17: #{output_transition_forward.1} parent=15 // pred_check
        %p106 = pneg %p53
      $region18: #{output_transition_forward.1} parent=15 // pred_check_branch
        %108 = sbr.rel (%p106) target = $region20
      $region19: #{output_transition_forward.1} parent=15 // pred_region
        %p109 = scmp.lt.s32.totalorder %s26, 1
        %s110 = scalar_select %p109, %s26, 1
        %p111 = scmp.lt.s32.totalorder %s27, 0
        %s112 = scalar_select %p111, %s27, 0
        %s113 = smul.addr %s110, 4
        %s114 = sadd.s32 %s112, %s113
        %s115 = smul.addr %s114, 4
        %s116 = scalar_lea.vmem %s2, %s115
      $region20: #{output_transition_forward.1} parent=15 // pred_fallthru
        _
    $region16: #{output_transition_forward.1} parent=5 // pred_fallthru
      _
    %p117 = scmp.le.s32.totalorder 1, %s19
    %p118 = scmp.lt.s32.totalorder %s19, 3
    %p119 = pnand %p117, %p118
    %p120 = pneg %p119
    // Predicated region
    $region21: #{output_transition_forward.1} parent=5 // pred_check
      _
    $region22: #{output_transition_forward.1} parent=5 // pred_check_branch
      %122 = sbr.rel (%p119) target = $region24
    $region23: #{output_transition_forward.1} parent=5 // pred_region
      %s123 = ssub.s32 %s19, 1
      %p124 = scmp.lt.s32.totalorder %s28, 1
      %s125 = scalar_select %p124, %s28, 1
      %p126 = scmp.lt.s32.totalorder %s29, 0
      %s127 = scalar_select %p126, %s29, 0
      %s128 = smul.addr %s125, 4
      %s129 = sadd.s32 %s127, %s128
      %s130 = smul.addr %s129, 4
      %s131 = scalar_lea.vmem %s2, %s130
      %p132 = pneg %p59
      %p133 = pneg %p56
      %p134 = pneg %p87
      %p135 = pneg %p84
      %p136 = scmp.lt.s32.totalorder %s28, 1
      %s137 = scalar_select %p136, %s28, 1
      %p138 = scmp.lt.s32.totalorder %s29, 0
      %s139 = scalar_select %p138, %s29, 0
      %s140 = smul.addr %s137, 3
      %s141 = sadd.s32 %s139, %s140
      %s142 = smul.addr %s141, 4
      %s143 = scalar_lea.vmem %s3, %s142
      %p144 = scmp.lt.s32.totalorder %s28, 1
      %s145 = scalar_select %p144, %s28, 1
      %p146 = scmp.lt.s32.totalorder %s29, 0
      %s147 = scalar_select %p146, %s29, 0
      %s148 = smul.addr %s145, 4
      %s149 = sadd.s32 %s147, %s148
      %s150 = smul.addr %s149, 4
      %s151 = scalar_lea.vmem %s2, %s150
      %p152 = scmp.lt.s32.totalorder %s28, 1
      %s153 = scalar_select %p152, %s28, 1
      %p154 = scmp.lt.s32.totalorder %s29, 0
      %s155 = scalar_select %p154, %s29, 0
      %s156 = smul.addr %s153, 3
      %s157 = sadd.s32 %s155, %s156
      %s158 = smul.addr %s157, 4
      %s159 = scalar_lea.vmem %s3, %s158
      %v160 = vld [vmem:[%s151] sm:$0xf]
      %s161 = sld [smem:[#allocation3]]
      %v162 = vstv %s161
      %v163 = vmul.f32 %v160, %v162
      %s164 = sld [smem:[#allocation4]]
      %v165 = vstv %s164
      %v166 = vadd.f32 %v163, %v165
      %s167 = scalar_lea.vmem %s151, 4
      %v168 = vld [vmem:[%s167] sm:$0xf]
      %s169 = sld [smem:[#allocation3 + $0x1]]
      %v170 = vstv %s169
      %v171 = vmul.f32 %v168, %v170
      %v172 = vadd.f32 %v166, %v171
      %s173 = scalar_lea.vmem %s151, 8
      %v174 = vld [vmem:[%s173] sm:$0xf]
      %s175 = sld [smem:[#allocation3 + $0x2]]
      %v176 = vstv %s175
      %v177 = vmul.f32 %v174, %v176
      %v178 = vadd.f32 %v172, %v177
      %s179 = scalar_lea.vmem %s151, 12
      %v180 = vld [vmem:[%s179] sm:$0xf]
      %s181 = sld [smem:[#allocation3 + $0x3]]
      %v182 = vstv %s181
      %v183 = vmul.f32 %v180, %v182
      %v184 = vadd.f32 %v178, %v183
      %185 = vst [vmem:[%s159] sm:$0xf] %v184
      %v186 = vld [vmem:[%s151] sm:$0xf]
      %s187 = sld [smem:[#allocation3 + $0x80]]
      %v188 = vstv %s187
      %v189 = vmul.f32 %v186, %v188
      %s190 = sld [smem:[#allocation4 + $0x1]]
      %v191 = vstv %s190
      %v192 = vadd.f32 %v189, %v191
      %v193 = vld [vmem:[%s167] sm:$0xf]
      %s194 = sld [smem:[#allocation3 + $0x81]]
      %v195 = vstv %s194
      %v196 = vmul.f32 %v193, %v195
      %v197 = vadd.f32 %v192, %v196
      %v198 = vld [vmem:[%s173] sm:$0xf]
      %s199 = sld [smem:[#allocation3 + $0x82]]
      %v200 = vstv %s199
      %v201 = vmul.f32 %v198, %v200
      %v202 = vadd.f32 %v197, %v201
      %v203 = vld [vmem:[%s179] sm:$0xf]
      %s204 = sld [smem:[#allocation3 + $0x83]]
      %v205 = vstv %s204
      %v206 = vmul.f32 %v203, %v205
      %v207 = vadd.f32 %v202, %v206
      %s208 = scalar_lea.vmem %s159, 4
      %209 = vst [vmem:[%s208] sm:$0xf] %v207
      %v210 = vld [vmem:[%s151] sm:$0xf]
      %s211 = sld [smem:[#allocation3 + $0x100]]
      %v212 = vstv %s211
      %v213 = vmul.f32 %v210, %v212
      %s214 = sld [smem:[#allocation4 + $0x2]]
      %v215 = vstv %s214
      %v216 = vadd.f32 %v213, %v215
      %v217 = vld [vmem:[%s167] sm:$0xf]
      %s218 = sld [smem:[#allocation3 + $0x101]]
      %v219 = vstv %s218
      %v220 = vmul.f32 %v217, %v219
      %v221 = vadd.f32 %v216, %v220
      %v222 = vld [vmem:[%s173] sm:$0xf]
      %s223 = sld [smem:[#allocation3 + $0x102]]
      %v224 = vstv %s223
      %v225 = vmul.f32 %v222, %v224
      %v226 = vadd.f32 %v221, %v225
      %v227 = vld [vmem:[%s179] sm:$0xf]
      %s228 = sld [smem:[#allocation3 + $0x103]]
      %v229 = vstv %s228
      %v230 = vmul.f32 %v227, %v229
      %v231 = vadd.f32 %v226, %v230
      %s232 = scalar_lea.vmem %s159, 8
      %233 = vst [vmem:[%s232] sm:$0xf] %v231
      %p234 = scmp.lt.s32.totalorder %s28, 1
      %s235 = scalar_select %p234, %s28, 1
      %p236 = scmp.lt.s32.totalorder %s29, 0
      %s237 = scalar_select %p236, %s29, 0
      %s238 = smul.addr %s235, 3
      %s239 = sadd.s32 %s237, %s238
      %s240 = smul.addr %s239, 4
      %s241 = scalar_lea.vmem %s3, %s240
      // Predicated region
      $region25: #{output_transition_forward.1} parent=23 // pred_check
        %p242 = pneg %p84
      $region26: #{output_transition_forward.1} parent=23 // pred_check_branch
        %244 = sbr.rel (%p242) target = $region28
      $region27: #{output_transition_forward.1} parent=23 // pred_region
        _
      $region28: #{output_transition_forward.1} parent=23 // pred_fallthru
        _
    $region24: #{output_transition_forward.1} parent=5 // pred_fallthru
      _
    %p245 = scmp.le.s32.totalorder 2, %s19
    // Predicated region
    $region29: #{output_transition_forward.1} parent=5 // pred_check
      %p246 = pneg %p245
    $region30: #{output_transition_forward.1} parent=5 // pred_check_branch
      %248 = sbr.rel (%p246) target = $region32
    $region31: #{output_transition_forward.1} parent=5 // pred_region
      %s249 = ssub.s32 %s19, 2
      // Predicated region
      $region33: #{output_transition_forward.1} parent=31 // pred_check
        %p250 = pneg %p90
      $region34: #{output_transition_forward.1} parent=31 // pred_check_branch
        %252 = sbr.rel (%p250) target = $region36
      $region35: #{output_transition_forward.1} parent=31 // pred_region
        %p253 = scmp.lt.s32.totalorder %s30, 1
        %s254 = scalar_select %p253, %s30, 1
        %p255 = scmp.lt.s32.totalorder %s31, 0
        %s256 = scalar_select %p255, %s31, 0
        %s257 = smul.addr %s254, 3
        %s258 = sadd.s32 %s256, %s257
        %s259 = smul.addr %s258, 4
        %s260 = scalar_lea.vmem %s3, %s259
      $region36: #{output_transition_forward.1} parent=31 // pred_fallthru
        _
    $region32: #{output_transition_forward.1} parent=5 // pred_fallthru
      _
  $region6: #{output_transition_forward.1} parent=0 // loop_footer
    %s23 = sadd.s32 1, %s19
  $region7: #{output_transition_forward.1} parent=0 // loop_footer_branch
    %18 = sbr.rel target = $region3
  $region8: #{output_transition_forward.1} parent=0 // loop_exit
    _

</llo_original>
